<compile_context>
chip_gen: v7x
topology: tpu7x:2x2x1
jax: 0.10.0
libtpu: 0.0.40
codegen_flags: <defaults>
</compile_context>

<pallas_src>
import jax
import jax.numpy as jnp
from jax.experimental import pallas as pl
from jax.experimental.pallas import tpu as pltpu


# -----------------------------------------------------------------------------
# Production path: exact identity, zero kernels launched.
# -----------------------------------------------------------------------------
def dummy_layer_norm(x, normalized_shape=None, eps=1e-5):
    """DummyLayerNorm.forward — exact identity; no kernel is launched.

    `normalized_shape` / `eps` are accepted and ignored, matching the PyTorch
    placeholder module.
    """
    return x


# -----------------------------------------------------------------------------
# Opt-in copy path A (preferred when a materialized copy is required):
# whole-array HBM -> HBM DMA, no VMEM roundtrip, no per-block pipeline overhead.
# -----------------------------------------------------------------------------
def _hbm_copy_kernel(x_hbm_ref, o_hbm_ref, sem):
    cp = pltpu.make_async_copy(x_hbm_ref, o_hbm_ref, sem)
    cp.start()
    cp.wait()


@jax.jit
def dummy_layer_norm_copy_dma(x):
    """Identity that returns an independent copy via a direct HBM->HBM DMA."""
    if x.size == 0 or x.ndim == 0:
        return x
    return pl.pallas_call(
        _hbm_copy_kernel,
        out_shape=jax.ShapeDtypeStruct(x.shape, x.dtype),
        in_specs=[pl.BlockSpec(memory_space=pl.ANY)],
        out_specs=pl.BlockSpec(memory_space=pl.ANY),
        scratch_shapes=[pltpu.SemaphoreType.DMA],
    )(x)


# -----------------------------------------------------------------------------
# Opt-in copy path B: VMEM-tiled copy (reference implementation).
# -----------------------------------------------------------------------------
_LANES = 128
_MAX_BLOCK_BYTES = 4 * 1024 * 1024      # 4 MiB/block: 2 bufs x (in+out) = 16 MiB
_VMEM_LIMIT_BYTES = 32 * 1024 * 1024    # explicit scoped-VMEM budget, safe on v5e/v6e/v7x
# TODO(synk): per-generation block tuning (v7x can take 6-8 MiB blocks under its
# 64 MiB VMEM; v5e is fine at 2-4 MiB once vmem_limit_bytes is raised as here).


def _copy_kernel(x_ref, o_ref):
    # Identity: DummyLayerNorm has no parameters and performs no normalization.
    o_ref[...] = x_ref[...]


def _tiled_copy_2d(x2d, block_rows):
    rows, cols = x2d.shape
    grid = (pl.cdiv(rows, block_rows),)
    return pl.pallas_call(
        _copy_kernel,
        out_shape=jax.ShapeDtypeStruct((rows, cols), x2d.dtype),
        grid=grid,
        in_specs=[pl.BlockSpec((block_rows, cols), lambda i: (i, 0))],
        out_specs=pl.BlockSpec((block_rows, cols), lambda i: (i, 0)),
        compiler_params=pltpu.CompilerParams(
            dimension_semantics=("parallel",),
            vmem_limit_bytes=_VMEM_LIMIT_BYTES,
        ),
    )(x2d)


@jax.jit
def dummy_layer_norm_copy_tiled(x):
    """Identity that returns an independent copy via a VMEM-tiled Pallas copy."""
    orig_shape = x.shape
    total = x.size
    if total == 0 or x.ndim == 0:
        return x

    itemsize = jnp.dtype(x.dtype).itemsize
    # Sublane packing multiple: 8 rows for 32-bit, 16 for 16-bit, 32 for 8-bit.
    sub = 8 * max(1, 4 // itemsize)

    if total % (sub * _LANES) == 0:
        # Free contiguous reshape to a lane-dense (rows, 128) view: every
        # vector load/store is fully packed (no masked vst.msk).
        rows = total // _LANES
        x2d = x.reshape(rows, _LANES)
    else:
        # Non-aligned sizes: keep the natural trailing dim and let Pallas mask
        # the partial last block — far cheaper than pad + slice (which would add
        # two full extra HBM passes).
        cols = orig_shape[-1]
        x2d = x.reshape(total // cols, cols)

    rows, cols = x2d.shape
    row_bytes = cols * itemsize
    max_rows = max(1, _MAX_BLOCK_BYTES // row_bytes)
    block_rows = min(rows, max_rows)

    # Give v7x's two TensorCores work: aim for >= 4 blocks when there is enough
    # data (no-op on v5e/v6e's single TC and for tiny inputs).
    target_blocks = 4
    if rows >= target_blocks * sub:
        block_rows = min(block_rows, max(sub, rows // target_blocks))

    # Block second-to-last dim must be a multiple of the sublane tile, or equal
    # the full extent.
    if block_rows < rows:
        block_rows = max(sub, (block_rows // sub) * sub)
        if block_rows >= rows:
            block_rows = rows

    out2d = _tiled_copy_2d(x2d, block_rows)
    return out2d.reshape(orig_shape)


if __name__ == "__main__":
    key = jax.random.PRNGKey(0)
    batch, seq, hidden = 2, 8, 32
    x = jax.random.normal(key, (batch, seq, hidden), dtype=jnp.float32)

    # Production path: exact no-op, zero kernels launched.
    y = jax.block_until_ready(dummy_layer_norm(x, normalized_shape=hidden))
    assert y.shape == x.shape and y.dtype == x.dtype
    assert bool(jnp.array_equal(y, x)), "fast-path identity mismatch"

    # Opt-in copy path A: direct HBM->HBM DMA.
    y_dma = jax.block_until_ready(dummy_layer_norm_copy_dma(x))
    assert y_dma.shape == x.shape and y_dma.dtype == x.dtype
    assert bool(jnp.array_equal(y_dma, x)), "dma copy mismatch"

    # Opt-in copy path B: VMEM-tiled copy (non-aligned branch: masked last dim).
    y_tiled = jax.block_until_ready(dummy_layer_norm_copy_tiled(x))
    assert y_tiled.shape == x.shape and y_tiled.dtype == x.dtype
    assert bool(jnp.array_equal(y_tiled, x)), "tiled copy mismatch"

    # Also exercise the lane-dense aligned branch of the tiled copy.
    x2 = jax.random.normal(jax.random.PRNGKey(0), (16, 8, 128), dtype=jnp.float32)
    y2 = jax.block_until_ready(dummy_layer_norm_copy_tiled(x2))
    assert bool(jnp.array_equal(y2, x2)), "tiled aligned copy mismatch"

    print("KERNEL_OK")
</pallas_src>

<mosaic_0001>
module attributes {stable_mosaic.version = 11 : i64} {
  func.func @_hbm_copy_kernel(%arg0: memref<2x8x32xf32, #tpu.memory_space<any>>, %arg1: memref<2x8x32xf32, #tpu.memory_space<any>>, %arg2: memref<!tpu.dma_semaphore, #tpu.memory_space<semaphore_mem>>) attributes {dimension_semantics = [], scalar_prefetch = 0 : i64, scratch_operands = 1 : i64, tpu.core_type = #tpu.core_type<tc>} {
    tpu.enqueue_dma source(%arg0 : memref<2x8x32xf32, #tpu.memory_space<any>>) target(%arg1 : memref<2x8x32xf32, #tpu.memory_space<any>>) target_semaphore(%arg2 : memref<!tpu.dma_semaphore, #tpu.memory_space<semaphore_mem>>)
    tpu.wait_dma2 semaphore(%arg2 : memref<!tpu.dma_semaphore, #tpu.memory_space<semaphore_mem>>) src(%arg0 : memref<2x8x32xf32, #tpu.memory_space<any>>) dst(%arg1 : memref<2x8x32xf32, #tpu.memory_space<any>>)
    return
  }
}

</mosaic_0001>

<llo_original>
// kernel: dummy_layer_norm_copy_dma.1
$region0: #{dummy_layer_norm_copy_dma.1}
  #allocation0 [shape = 'u32[]', space=smem, size = 0x4, offset = 0x4, fixed_abs, tag = 'smem constant byte address 0x4 - core index']
  #allocation1 [shape = 'u32[144,128]{1,0:T(1,128)}', space=vmem, size = 0x12000, scoped, tag = 'internal scratch']
  #allocation2 [shape = 's32[1]{0}', space=sflag, size = 0x4, scoped, tag = 'scratch operand']
  #allocation3 [shape = 's32[]', space=sflag, size = 0x4, offset = 0, fixed_abs, tag = 'sflag constant byte address 0x0 - dummy sync flag']
  #allocation4 [shape = 'u32[0]{0}', space=smem, size = 0, offset = 0, fixed_abs, tag = 'smem constant byte address 0x0 - null']
  %s0 = inlined_call_operand.hbm [shape: f32[2,8,32], index: 0, kind: input, shape index: {}]
  %s1 = inlined_call_operand.hbm [shape: f32[2,8,32], index: 1, kind: output, shape index: {}]
  %s2 = sld [smem:[#allocation0]]
  $region2: #{dummy_layer_norm_copy_dma.1} parent=0
    _
  %s4 = ssub.s32 1, %s2
  %s5 = scalar_select 0, %s4, %s2
  %s7 = sshll.u32 1, 14
  %s8 = sxor.u32 4294967295, %s7
  %s11 = sshll.u32 3, 24
  %s12 = sxor.u32 4294967295, %s11
  %s13 = sand.u32 0, %s12
  %s15 = sor.u32 %s13, 0
  %18 = dma.general %s0, 256, %s1, [#allocation2], [#allocation3], [#allocation4], %s15, 0
  %s19 = smul.u32 2, 8
  %s20 = smul.u32 %s19, 1
  %s21 = sshll.u32 %s20, 4
  %22 = dma.done [#allocation2], %s21
  %23 = vsyncmov [#allocation2]
  %s24 = vpop.sfrf %23
  %p25 = scmp.eq.s32.totalorder %s24, 0
  %p26 = pneg %p25
  %28 = shalt.err (%p26)

</llo_original>
